<compile_context>
chip_gen: v6e
topology: v6e:2x2x1
jax: 0.10.0
libtpu: 0.0.40
codegen_flags: <defaults>
</compile_context>

<pallas_src>
import functools

import jax
import jax.numpy as jnp
from jax.experimental import pallas as pl
from jax.experimental.pallas import tpu as pltpu


def _round_up(v, m):
    return ((v + m - 1) // m) * m


def _padded_bytes(shape, dtype):
    """Physical VMEM footprint: last dim rounds up to 128 lanes, second-to-last
    to the per-dtype sublane granule (8 for 4B, 16 for 2B, 32 for 1B)."""
    itemsize = jnp.dtype(dtype).itemsize
    sublane = {4: 8, 2: 16, 1: 32}.get(itemsize, 8)
    dims = list(shape)
    if len(dims) >= 1:
        dims[-1] = _round_up(dims[-1], 128)
    if len(dims) >= 2:
        dims[-2] = _round_up(dims[-2], sublane)
    n = 1
    for d in dims:
        n *= max(int(d), 1)
    return n * itemsize


def _vmem_capacity_bytes():
    try:
        info = pltpu.get_tpu_info()
        cap = getattr(info, "vmem_capacity_bytes", None)
        if cap:
            return int(cap)
    except Exception:
        pass
    return 64 * 1024 * 1024          # conservative default: v7x per-TC VMEM


def _pick_batch_tile(batch, step_bytes, budget):
    """Largest batch tile whose per-step footprint fits `budget`, capped so the
    grid has >= 2 steps whenever batch >= 2 (lets v7x split the parallel batch
    axis across both TensorCores)."""
    cap = batch if batch < 2 else max(1, batch // 2)
    bt = 1
    for cand in range(1, cap + 1):
        if step_bytes(cand) <= budget:
            bt = cand
    return bt


def _conv1d_im2col_kernel(x_ref, w_ref, b_ref, o_ref, xpad_ref, col_ref, *,
                          batch_tile, seq_len, out_len, kernel_size, c_in,
                          pad, pad_top):
    """One batch tile of the 1-D convolution as a single im2col matmul.

    x_ref   : (bt, T, C_in)              bf16  input tile
    w_ref   : (K*C_in, C_out)            bf16  conv weights (im2col layout)
    b_ref   : (1, C_out)                 f32   bias
    o_ref   : (bt, T_out, C_out)         f32   output tile (unpadded)
    xpad_ref: (bt, pad_top+T+pad, C_in)  bf16  scratch: halo-padded copy of x
    col_ref : (bt*T_out, K*C_in)         bf16  scratch: im2col LHS
    """
    scratch_rows = xpad_ref.shape[1]

    # Zero only the halo rows (interior is fully overwritten below).
    if pad > 0:
        xpad_ref[:, :pad_top, :] = jnp.zeros(
            (batch_tile, pad_top, c_in), xpad_ref.dtype)
        xpad_ref[:, pad_top + seq_len:scratch_rows, :] = jnp.zeros(
            (batch_tile, scratch_rows - pad_top - seq_len, c_in),
            xpad_ref.dtype)

    # Copy the input tile into the interior: bf16 -> bf16, sublane-aligned
    # destination offset (pad_top is a multiple of 8), no casts.
    xpad_ref[:, pad_top:pad_top + seq_len, :] = x_ref[...]

    # Build the im2col LHS once per grid step: K shifted copies.
    base = pad_top - pad
    for k in range(kernel_size):                      # static unroll, K small
        win = xpad_ref[:, base + k:base + k + out_len, :]
        col_ref[:, k * c_in:(k + 1) * c_in] = win.reshape(
            batch_tile * out_len, c_in)

    # One MXU matmul (bf16 x bf16 -> f32 accumulate), one bias add, one store.
    y = jnp.dot(col_ref[...], w_ref[...], preferred_element_type=jnp.float32)
    y = y + b_ref[0]
    o_ref[...] = y.reshape(o_ref.shape)


def cnn_encoder_forward(x, weight, bias, input_dim, kernel_size):
    """Pallas implementation of CNNEncoderBase.forward.

    x      : (B, ...) reshaped to (B, T, input_dim)  (same as torch .view)
    weight : (C_out, C_in, K)   -- torch Conv1d weight layout
    bias   : (C_out,)
    returns: (B, T_out, C_out) f32, T_out = T + 2*pad - K + 1, pad = (K-1)//2
    """
    batch = x.shape[0]
    x3 = x.reshape(batch, -1, input_dim)              # (B, T, C_in)
    seq = x3.shape[1]
    c_in = input_dim
    c_out = weight.shape[0]
    pad = (kernel_size - 1) // 2
    out_len = seq + 2 * pad - kernel_size + 1
    pad_top = _round_up(pad, 8) if pad > 0 else 0     # aligned copy-in offset
    scratch_rows = pad_top + seq + pad

    x_bf16 = x3.astype(jnp.bfloat16)
    # (C_out, C_in, K) -> (K, C_in, C_out) -> (K*C_in, C_out): im2col RHS.
    w2 = jnp.transpose(weight, (2, 1, 0)).reshape(kernel_size * c_in, c_out)
    w2 = w2.astype(jnp.bfloat16)
    b2 = bias.astype(jnp.float32).reshape(1, c_out)

    # Per-generation VMEM budget: <=48 MiB on v7x, up to 96 MiB on v5e/v6e.
    vmem_limit = min((_vmem_capacity_bytes() * 3) // 4, 96 * 1024 * 1024)
    block_budget = vmem_limit - (2 << 20)             # small headroom

    def step_bytes(bt):
        return (
            2 * _padded_bytes((bt, seq, c_in), jnp.bfloat16)                # x (dbl buf)
            + 2 * _padded_bytes((kernel_size * c_in, c_out), jnp.bfloat16)  # weights
            + 2 * _padded_bytes((1, c_out), jnp.float32)                    # bias
            + 2 * _padded_bytes((bt, out_len, c_out), jnp.float32)          # out (dbl buf)
            + _padded_bytes((bt, scratch_rows, c_in), jnp.bfloat16)         # xpad scratch
            + _padded_bytes((bt * out_len, kernel_size * c_in), jnp.bfloat16))  # im2col

    bt = _pick_batch_tile(batch, step_bytes, block_budget)
    # TODO(synk): also tile the time axis for sequences too long for one tile.

    # Ragged / prime batches: zero-pad to a multiple of the tile instead of
    # silently degrading to one element per grid step.
    batch_pad = _round_up(batch, bt)
    if batch_pad != batch:
        x_bf16 = jnp.pad(x_bf16, ((0, batch_pad - batch), (0, 0), (0, 0)))
    grid = (batch_pad // bt,)

    kernel = functools.partial(
        _conv1d_im2col_kernel, batch_tile=bt, seq_len=seq, out_len=out_len,
        kernel_size=kernel_size, c_in=c_in, pad=pad, pad_top=pad_top)

    cost = pl.CostEstimate(
        flops=2 * batch * out_len * kernel_size * c_in * c_out,   # honest (unpadded) flops
        transcendentals=0,
        bytes_accessed=(x_bf16.size * 2 + w2.size * 2 + b2.size * 4
                        + batch_pad * out_len * c_out * 4),
    )

    out = pl.pallas_call(
        kernel,
        out_shape=jax.ShapeDtypeStruct((batch_pad, out_len, c_out), jnp.float32),
        grid_spec=pltpu.PrefetchScalarGridSpec(
            num_scalar_prefetch=0,
            grid=grid,
            in_specs=[
                pl.BlockSpec((bt, seq, c_in), lambda g: (g, 0, 0)),
                pl.BlockSpec((kernel_size * c_in, c_out), lambda g: (0, 0)),
                pl.BlockSpec((1, c_out), lambda g: (0, 0)),
            ],
            out_specs=pl.BlockSpec((bt, out_len, c_out), lambda g: (g, 0, 0)),
            scratch_shapes=[
                pltpu.VMEM((bt, scratch_rows, c_in), jnp.bfloat16),
                pltpu.VMEM((bt * out_len, kernel_size * c_in), jnp.bfloat16),
            ],
        ),
        compiler_params=pltpu.CompilerParams(
            dimension_semantics=("parallel",),        # megacore-splittable
            vmem_limit_bytes=vmem_limit,
        ),
        cost_estimate=cost,
    )(x_bf16, w2, b2)

    if batch_pad != batch:
        out = out[:batch]
    return out


def reference_forward(x, weight, bias, input_dim, kernel_size):
    """Pure-JAX reference matching torch Conv1d semantics."""
    batch = x.shape[0]
    x = x.reshape(batch, -1, input_dim).astype(jnp.float32)
    pad = (kernel_size - 1) // 2
    x_ncw = jnp.transpose(x, (0, 2, 1))              # (B, C_in, T)
    y = jax.lax.conv_general_dilated(
        x_ncw, weight.astype(jnp.float32),
        window_strides=(1,), padding=[(pad, pad)],
        dimension_numbers=("NCH", "OIH", "NCH"),
        precision=jax.lax.Precision.HIGHEST,
    )
    y = y + bias.reshape(1, -1, 1)
    return jnp.transpose(y, (0, 2, 1))               # (B, T_out, C_out)


if __name__ == "__main__":
    # Module hyperparameters (small, consistent with the forward pass).
    input_dim = 8
    output_dim = 16
    kernel_size = 3
    batch = 2
    seq = 16

    key = jax.random.PRNGKey(0)
    k_x, k_w, k_b = jax.random.split(key, 3)

    # Deterministic synthetic parameters (torch Conv1d shapes).
    weight = 0.1 * jax.random.normal(
        k_w, (output_dim, input_dim, kernel_size), dtype=jnp.float32)
    bias = 0.1 * jax.random.normal(k_b, (output_dim,), dtype=jnp.float32)

    # Input: (B, T, input_dim); .view(B, -1, input_dim) is a no-op reshape here.
    x = jax.random.normal(k_x, (batch, seq, input_dim), dtype=jnp.float32)

    y = cnn_encoder_forward(x, weight, bias, input_dim, kernel_size)
    y = jax.block_until_ready(y)

    # Kernel feeds the MXU bf16 inputs/weights (f32 accumulate); compare against
    # the f32 reference evaluated on bf16-rounded inputs.
    x_q = x.astype(jnp.bfloat16).astype(jnp.float32)
    w_q = weight.astype(jnp.bfloat16).astype(jnp.float32)
    y_ref = reference_forward(x_q, w_q, bias, input_dim, kernel_size)

    assert y.shape == (batch, seq, output_dim), y.shape
    assert jnp.allclose(y, y_ref, atol=1e-4, rtol=1e-4), "mismatch vs reference"

    print("KERNEL_OK")
</pallas_src>

<mosaic_0001>
module attributes {stable_mosaic.version = 11 : i64} {
  func.func @_conv1d_im2col_kernel(%arg0: i32, %arg1: memref<1x16x8xbf16, #tpu.memory_space<vmem>>, %arg2: memref<24x16xbf16, #tpu.memory_space<vmem>>, %arg3: memref<1x16xf32, #tpu.memory_space<vmem>>, %arg4: memref<1x16x16xf32, #tpu.memory_space<vmem>>, %arg5: memref<1x25x8xbf16, #tpu.memory_space<vmem>>, %arg6: memref<16x24xbf16, #tpu.memory_space<vmem>>) attributes {dimension_semantics = [#tpu.dimension_semantics<parallel>], iteration_bounds = array<i64: 2>, scalar_prefetch = 0 : i64, scratch_operands = 2 : i64, tpu.core_type = #tpu.core_type<tc>, window_params = [{transform_indices = @transform_0, window_bounds = array<i64: 1, 16, 8>}, {pipeline_mode = #tpu.pipeline_mode<synchronous>, transform_indices = @transform_1, window_bounds = array<i64: 24, 16>}, {pipeline_mode = #tpu.pipeline_mode<synchronous>, transform_indices = @transform_2, window_bounds = array<i64: 1, 16>}, {transform_indices = @transform_3, window_bounds = array<i64: 1, 16, 16>}]} {
    %cst = arith.constant 0.000000e+00 : bf16
    %0 = vector.broadcast %cst : bf16 to vector<1x8x8xbf16>
    %c0 = arith.constant 0 : index
    %c0_0 = arith.constant 0 : index
    %c0_1 = arith.constant 0 : index
    %1 = vector.load %arg5[%c0, %c0_0, %c0_1] : memref<1x25x8xbf16, #tpu.memory_space<vmem>>, vector<1x8x8xbf16>
    tpu.vector_store %arg5[%c0, %c0_0, %c0_1], %0 {strides = array<i32>} : memref<1x25x8xbf16, #tpu.memory_space<vmem>>, vector<1x8x8xbf16>,
    %cst_2 = arith.constant 0.000000e+00 : bf16
    %2 = vector.broadcast %cst_2 : bf16 to vector<1x1x8xbf16>
    %c0_3 = arith.constant 0 : index
    %c24 = arith.constant 24 : index
    %c0_4 = arith.constant 0 : index
    %3 = vector.load %arg5[%c0_3, %c24, %c0_4] : memref<1x25x8xbf16, #tpu.memory_space<vmem>>, vector<1x1x8xbf16>
    tpu.vector_store %arg5[%c0_3, %c24, %c0_4], %2 {strides = array<i32>} : memref<1x25x8xbf16, #tpu.memory_space<vmem>>, vector<1x1x8xbf16>,
    %c0_5 = arith.constant 0 : index
    %c0_6 = arith.constant 0 : index
    %c0_7 = arith.constant 0 : index
    %4 = vector.load %arg1[%c0_5, %c0_6, %c0_7] : memref<1x16x8xbf16, #tpu.memory_space<vmem>>, vector<1x16x8xbf16>
    %c0_8 = arith.constant 0 : index
    %c8 = arith.constant 8 : index
    %c0_9 = arith.constant 0 : index
    %5 = vector.load %arg5[%c0_8, %c8, %c0_9] : memref<1x25x8xbf16, #tpu.memory_space<vmem>>, vector<1x16x8xbf16>
    tpu.vector_store %arg5[%c0_8, %c8, %c0_9], %4 {strides = array<i32>} : memref<1x25x8xbf16, #tpu.memory_space<vmem>>, vector<1x16x8xbf16>,
    %c0_10 = arith.constant 0 : index
    %c7 = arith.constant 7 : index
    %c0_11 = arith.constant 0 : index
    %6 = vector.load %arg5[%c0_10, %c7, %c0_11] : memref<1x25x8xbf16, #tpu.memory_space<vmem>>, vector<1x16x8xbf16>
    %7 = vector.shape_cast %6 : vector<1x16x8xbf16> to vector<16x8xbf16>
    %c0_12 = arith.constant 0 : index
    %c0_13 = arith.constant 0 : index
    %8 = vector.load %arg6[%c0_12, %c0_13] : memref<16x24xbf16, #tpu.memory_space<vmem>>, vector<16x8xbf16>
    tpu.vector_store %arg6[%c0_12, %c0_13], %7 {strides = array<i32>} : memref<16x24xbf16, #tpu.memory_space<vmem>>, vector<16x8xbf16>,
    %c0_14 = arith.constant 0 : index
    %c8_15 = arith.constant 8 : index
    %c0_16 = arith.constant 0 : index
    %9 = vector.load %arg5[%c0_14, %c8_15, %c0_16] : memref<1x25x8xbf16, #tpu.memory_space<vmem>>, vector<1x16x8xbf16>
    %10 = vector.shape_cast %9 : vector<1x16x8xbf16> to vector<16x8xbf16>
    %c0_17 = arith.constant 0 : index
    %c8_18 = arith.constant 8 : index
    %11 = vector.load %arg6[%c0_17, %c8_18] : memref<16x24xbf16, #tpu.memory_space<vmem>>, vector<16x8xbf16>
    tpu.vector_store %arg6[%c0_17, %c8_18], %10 {strides = array<i32>} : memref<16x24xbf16, #tpu.memory_space<vmem>>, vector<16x8xbf16>,
    %c0_19 = arith.constant 0 : index
    %c9 = arith.constant 9 : index
    %c0_20 = arith.constant 0 : index
    %12 = vector.load %arg5[%c0_19, %c9, %c0_20] : memref<1x25x8xbf16, #tpu.memory_space<vmem>>, vector<1x16x8xbf16>
    %13 = vector.shape_cast %12 : vector<1x16x8xbf16> to vector<16x8xbf16>
    %c0_21 = arith.constant 0 : index
    %c16 = arith.constant 16 : index
    %14 = vector.load %arg6[%c0_21, %c16] : memref<16x24xbf16, #tpu.memory_space<vmem>>, vector<16x8xbf16>
    tpu.vector_store %arg6[%c0_21, %c16], %13 {strides = array<i32>} : memref<16x24xbf16, #tpu.memory_space<vmem>>, vector<16x8xbf16>,
    %c0_22 = arith.constant 0 : index
    %c0_23 = arith.constant 0 : index
    %15 = vector.load %arg6[%c0_22, %c0_23] : memref<16x24xbf16, #tpu.memory_space<vmem>>, vector<16x24xbf16>
    %c0_24 = arith.constant 0 : index
    %c0_25 = arith.constant 0 : index
    %16 = vector.load %arg2[%c0_24, %c0_25] : memref<24x16xbf16, #tpu.memory_space<vmem>>, vector<24x16xbf16>
    %cst_26 = arith.constant dense<0.000000e+00> : vector<16x16xf32>
    %17 = tpu.matmul %15, %16, %cst_26 {dimension_numbers = #tpu.dot_dimension_numbers<[1], [0], [0], [1], [0, 0, 1, 1], [], []>} : vector<16x24xbf16>, vector<24x16xbf16>, vector<16x16xf32> -> vector<16x16xf32>
    %c0_27 = arith.constant 0 : index
    %c0_28 = arith.constant 0 : index
    %18 = vector.load %arg3[%c0_27, %c0_28] : memref<1x16xf32, #tpu.memory_space<vmem>>, vector<1x16xf32>
    %19 = vector.shape_cast %18 : vector<1x16xf32> to vector<16xf32>
    %20 = vector.shape_cast %19 : vector<16xf32> to vector<1x16xf32>
    %21 = vector.broadcast %20 : vector<1x16xf32> to vector<16x16xf32>
    %22 = arith.addf %17, %21 : vector<16x16xf32>
    %23 = vector.shape_cast %22 : vector<16x16xf32> to vector<1x16x16xf32>
    %c0_29 = arith.constant 0 : index
    %c0_30 = arith.constant 0 : index
    %c0_31 = arith.constant 0 : index
    %24 = vector.load %arg4[%c0_29, %c0_30, %c0_31] : memref<1x16x16xf32, #tpu.memory_space<vmem>>, vector<1x16x16xf32>
    tpu.vector_store %arg4[%c0_29, %c0_30, %c0_31], %23 {strides = array<i32>} : memref<1x16x16xf32, #tpu.memory_space<vmem>>, vector<1x16x16xf32>,
    return
  }
  func.func @transform_0(%arg0: i32) -> (i32, i32, i32) {
    %c0_i32 = arith.constant 0 : i32
    %c0_i32_0 = arith.constant 0 : i32
    %c0_i32_1 = arith.constant 0 : i32
    return %arg0, %c0_i32, %c0_i32_0 : i32, i32, i32
  }
  func.func @transform_1(%arg0: i32) -> (i32, i32) {
    %c0_i32 = arith.constant 0 : i32
    %c0_i32_0 = arith.constant 0 : i32
    %c0_i32_1 = arith.constant 0 : i32
    return %c0_i32, %c0_i32_0 : i32, i32
  }
  func.func @transform_2(%arg0: i32) -> (i32, i32) {
    %c0_i32 = arith.constant 0 : i32
    %c0_i32_0 = arith.constant 0 : i32
    %c0_i32_1 = arith.constant 0 : i32
    return %c0_i32, %c0_i32_0 : i32, i32
  }
  func.func @transform_3(%arg0: i32) -> (i32, i32, i32) {
    %c0_i32 = arith.constant 0 : i32
    %c0_i32_0 = arith.constant 0 : i32
    %c0_i32_1 = arith.constant 0 : i32
    return %arg0, %c0_i32, %c0_i32_0 : i32, i32, i32
  }
}

</mosaic_0001>

<llo_original>
// kernel: tpu_custom_call.1
$region0: #{tpu_custom_call.1}
  #allocation0 [shape = 'u32[]', space=smem, size = 0x4, offset = 0x4, fixed_abs, tag = 'smem constant byte address 0x4 - core index']
  #allocation1 [shape = 'u32[144,128]{1,0:T(1,128)}', space=vmem, size = 0x12000, scoped, tag = 'internal scratch']
  #allocation2 [shape = 'bf16[1,25,8]{2,1,0:T(8,128)(2,1)}', space=vmem, size = 0x2000, scoped, tag = 'scratch operand']
  #allocation3 [shape = 'bf16[16,24]{1,0:T(8,128)(2,1)}', space=vmem, size = 0x1000, scoped, tag = 'scratch operand']
  %s0 = inlined_call_operand.vmem [shape: bf16[2,16,8], index: 0, kind: input, shape index: {}]
  %s1 = inlined_call_operand.vmem [shape: bf16[24,16], index: 1, kind: input, shape index: {}]
  %s2 = inlined_call_operand.vmem [shape: f32[1,16], index: 2, kind: input, shape index: {}]
  %s3 = inlined_call_operand.hbm [shape: f32[2,16,16], index: 3, kind: output, shape index: {}]
  %s4 = sld [smem:[#allocation0]]
  $region45: #{tpu_custom_call.1} parent=0
    _
  %s6 = ssub.s32 1, %s4
  %s7 = scalar_select 0, %s6, %s4
  $region1: #{tpu_custom_call.1} parent=0
    #allocation4 [shape = 'u8[16384]{0}', space=vmem, size = 0x4000, scoped, tag = 'output window, operand 0']
    #allocation5 [shape = 's32[2]{0}', space=sflag, size = 0x8, scoped, tag = 'scoped memory for tpu_custom_call.1']
    %8 = vsyncpa [#allocation5], 0
    %s9 = scalar_lea.sflag [#allocation5], 1
    %10 = vsyncpa %s9, 0
    loop: start=0, step=1, limit=4
    $region2: #{tpu_custom_call.1} parent=1 // loop_pre_header
      _
    $region3: #{tpu_custom_call.1} parent=1 // loop_header
      %s12 = sphi 0, %s16
      %p13 = scmp.ge.s32.totalorder %s12, 4
      %s22 = sphi 0, %s24
      %s25 = sphi 0, %s22
      %s26 = sphi 0, %s25
      %s42 = sphi 0, %s26
      %s46 = sphi 0, %s46
      %s48 = sphi 0, %s46
      %s49 = sphi 0, %s48
      %s63 = sphi 0, %s49
      %s67 = sphi 0, %s67
      %s69 = sphi 0, %s67
      %s70 = sphi 0, %s69
      %s84 = sphi 0, %s70
      %s90 = sphi 0, %s92
      %s93 = sphi 0, %s90
      %s94 = sphi 0, %s93
      %s110 = sphi 0, %s94
    $region4: #{tpu_custom_call.1} parent=1 // loop_header_branch
      %15 = sbr.rel (%p13) target = $region8
    $region5: #{tpu_custom_call.1} parent=1 // loop_body
      %s17 = ssub.s32 %s12, 1
      %s18 = ssub.s32 %s12, 2
      %s19 = sadd.s32 %s12, 1
      %s20 = ssub.s32 %s12, %s19
      %p21 = scmp.eq.s32.totalorder %s20, 0
      %s23 = sadd.s32 %s22, 1
      %s24 = scalar_select %p21, %s22, %s23
      %p27 = pneg %p21
      %p28 = scmp.eq.s32.totalorder %s12, 1
      %p29 = por %p27, %p28
      %p30 = scmp.ne.s32.totalorder %s22, %s25
      %p31 = scmp.eq.s32.totalorder %s12, 0
      %p32 = por %p30, %p31
      %p33 = scmp.ne.s32.totalorder %s22, %s25
      %p34 = scmp.eq.s32.totalorder %s17, 1
      %p35 = por %p33, %p34
      %p36 = scmp.ne.s32.totalorder %s25, %s26
      %p37 = scmp.eq.s32.totalorder %s17, 0
      %p38 = por %p36, %p37
      %p39 = scmp.ne.s32.totalorder %s25, %s26
      %p40 = scmp.eq.s32.totalorder %s18, 1
      %p41 = por %p39, %p40
      %p43 = scmp.ne.s32.totalorder %s26, %s42
      %p44 = scmp.eq.s32.totalorder %s18, 0
      %p45 = por %p43, %p44
      %s47 = sadd.s32 %s46, 1
      %p50 = scmp.eq.s32.totalorder %s12, 1
      %p51 = scmp.ne.s32.totalorder %s46, %s48
      %p52 = scmp.eq.s32.totalorder %s12, 0
      %p53 = por %p51, %p52
      %p54 = scmp.ne.s32.totalorder %s46, %s48
      %p55 = scmp.eq.s32.totalorder %s17, 1
      %p56 = por %p54, %p55
      %p57 = scmp.ne.s32.totalorder %s48, %s49
      %p58 = scmp.eq.s32.totalorder %s17, 0
      %p59 = por %p57, %p58
      %p60 = scmp.ne.s32.totalorder %s48, %s49
      %p61 = scmp.eq.s32.totalorder %s18, 1
      %p62 = por %p60, %p61
      %p64 = scmp.ne.s32.totalorder %s49, %s63
      %p65 = scmp.eq.s32.totalorder %s18, 0
      %p66 = por %p64, %p65
      %s68 = sadd.s32 %s67, 1
      %p71 = scmp.eq.s32.totalorder %s12, 1
      %p72 = scmp.ne.s32.totalorder %s67, %s69
      %p73 = scmp.eq.s32.totalorder %s12, 0
      %p74 = por %p72, %p73
      %p75 = scmp.ne.s32.totalorder %s67, %s69
      %p76 = scmp.eq.s32.totalorder %s17, 1
      %p77 = por %p75, %p76
      %p78 = scmp.ne.s32.totalorder %s69, %s70
      %p79 = scmp.eq.s32.totalorder %s17, 0
      %p80 = por %p78, %p79
      %p81 = scmp.ne.s32.totalorder %s69, %s70
      %p82 = scmp.eq.s32.totalorder %s18, 1
      %p83 = por %p81, %p82
      %p85 = scmp.ne.s32.totalorder %s70, %s84
      %p86 = scmp.eq.s32.totalorder %s18, 0
      %p87 = por %p85, %p86
      %s88 = ssub.s32 %s12, %s19
      %p89 = scmp.eq.s32.totalorder %s88, 0
      %s91 = sadd.s32 %s90, 1
      %s92 = scalar_select %p89, %s90, %s91
      %p95 = pneg %p89
      %p96 = scmp.eq.s32.totalorder %s12, 1
      %p97 = por %p95, %p96
      %p98 = scmp.ne.s32.totalorder %s90, %s93
      %p99 = scmp.eq.s32.totalorder %s12, 0
      %p100 = por %p98, %p99
      %p101 = scmp.ne.s32.totalorder %s90, %s93
      %p102 = scmp.eq.s32.totalorder %s17, 1
      %p103 = por %p101, %p102
      %p104 = scmp.ne.s32.totalorder %s93, %s94
      %p105 = scmp.eq.s32.totalorder %s17, 0
      %p106 = por %p104, %p105
      %p107 = scmp.ne.s32.totalorder %s93, %s94
      %p108 = scmp.eq.s32.totalorder %s18, 1
      %p109 = por %p107, %p108
      %p111 = scmp.ne.s32.totalorder %s94, %s110
      %p112 = scmp.eq.s32.totalorder %s18, 0
      %p113 = por %p111, %p112
      %p114 = scmp.le.s32.totalorder 1, %s12
      %p115 = scmp.lt.s32.totalorder %s12, 3
      %p116 = pnand %p114, %p115
      %p117 = pneg %p116
      // Predicated region
      $region9: #{tpu_custom_call.1} parent=5 // pred_check
        _
      $region10: #{tpu_custom_call.1} parent=5 // pred_check_branch
        %119 = sbr.rel (%p116) target = $region12
      $region11: #{tpu_custom_call.1} parent=5 // pred_region
        %s120 = ssub.s32 %s12, 1
        // Predicated region
        $region13: #{tpu_custom_call.1} parent=11 // pred_check
          %p121 = pneg %p59
        $region14: #{tpu_custom_call.1} parent=11 // pred_check_branch
          %123 = sbr.rel (%p121) target = $region16
        $region15: #{tpu_custom_call.1} parent=11 // pred_region
          _
        $region16: #{tpu_custom_call.1} parent=11 // pred_fallthru
          _
        // Predicated region
        $region17: #{tpu_custom_call.1} parent=11 // pred_check
          %p124 = pneg %p80
        $region18: #{tpu_custom_call.1} parent=11 // pred_check_branch
          %126 = sbr.rel (%p124) target = $region20
        $region19: #{tpu_custom_call.1} parent=11 // pred_region
          _
        $region20: #{tpu_custom_call.1} parent=11 // pred_fallthru
          _
      $region12: #{tpu_custom_call.1} parent=5 // pred_fallthru
        _
      %p127 = scmp.lt.s32.totalorder %s12, 2
      // Predicated region
      $region21: #{tpu_custom_call.1} parent=5 // pred_check
        %p128 = pneg %p127
      $region22: #{tpu_custom_call.1} parent=5 // pred_check_branch
        %130 = sbr.rel (%p128) target = $region24
      $region23: #{tpu_custom_call.1} parent=5 // pred_region
        // Predicated region
        $region25: #{tpu_custom_call.1} parent=23 // pred_check
          %p131 = pneg %p32
        $region26: #{tpu_custom_call.1} parent=23 // pred_check_branch
          %133 = sbr.rel (%p131) target = $region28
        $region27: #{tpu_custom_call.1} parent=23 // pred_region
          %p134 = scmp.lt.s32.totalorder %s12, 1
          %s135 = scalar_select %p134, %s12, 1
          %s136 = smul.addr %s135, 2
          %s137 = smul.addr %s136, 4
          %s138 = scalar_lea.vmem %s0, %s137
        $region28: #{tpu_custom_call.1} parent=23 // pred_fallthru
          _
      $region24: #{tpu_custom_call.1} parent=5 // pred_fallthru
        _
      %p139 = scmp.le.s32.totalorder 1, %s12
      %p140 = scmp.lt.s32.totalorder %s12, 3
      %p141 = pnand %p139, %p140
      %p142 = pneg %p141
      // Predicated region
      $region29: #{tpu_custom_call.1} parent=5 // pred_check
        _
      $region30: #{tpu_custom_call.1} parent=5 // pred_check_branch
        %144 = sbr.rel (%p141) target = $region32
      $region31: #{tpu_custom_call.1} parent=5 // pred_region
        %s145 = ssub.s32 %s12, 1
        %p146 = scmp.lt.s32.totalorder %s17, 1
        %s147 = scalar_select %p146, %s17, 1
        %s148 = smul.addr %s147, 2
        %s149 = smul.addr %s148, 4
        %s150 = scalar_lea.vmem %s0, %s149
        %p151 = pneg %p38
        %p152 = pneg %p35
        %p153 = pneg %p59
        %p154 = pneg %p56
        %p155 = pneg %p80
        %p156 = pneg %p77
        %p157 = pneg %p106
        %p158 = pneg %p103
        %s159 = sand.u32 %s93, 1
        %s160 = scalar_lea.sflag [#allocation5], %s159
        %s161 = sand.u32 %s93, 1
        %s162 = smul.addr %s161, 16
        %s163 = scalar_lea.vmem [#allocation4], %s162
        %p164 = scmp.lt.s32.totalorder %s17, 1
        %s165 = scalar_select %p164, %s17, 1
        %s166 = smul.addr %s165, 2
        %s167 = smul.addr %s166, 4
        %s168 = scalar_lea.vmem %s0, %s167
        %vm170 = vcmask 60416
        %171 = vst.msk [vmem:[#allocation2] sm:$0xf] %vm170, 0
        %vm172 = vcmask 57344
        %vm173 = vsmask.f32 256
        %vm174 = vmand %vm172, %vm173
        %v175 = vld [vmem:[#allocation2 + $0xc] sm:$0x1]
        %v176 = vsel %vm174, 0, %v175
        %177 = vst [vmem:[#allocation2 + $0xc] sm:$0x1] %v176
        %v178 = vld [vmem:[%s168] sm:$0xf]
        %v179 = vld [vmem:[%s168 + $0x4] sm:$0xf]
        %180 = vst.msk [vmem:[#allocation2 + $0x4] sm:$0xf] %vm170, %v178
        %181 = vst.msk [vmem:[#allocation2 + $0x8] sm:$0xf] %vm170, %v179
        %v182 = vld [vmem:[#allocation2] sm:$0x8]
        %v183 = vld [vmem:[#allocation2 + $0x4] sm:$0xf]
        %v184 = vld [vmem:[#allocation2 + $0x8] sm:$0xf]
        %vm185 = vsmask.f32 4368
        %vm186 = vmor %vm173, %vm185
        %v188 = vshrl.u32 %v182, 16
        %v190 = vrot.slane %v188, 7
        %v191 = vrot.slane %v190, 4
        %v193 = vshrl.u32 %v183, 16
        %v195 = vrot.slane %v193, 7
        %v196 = vshll.u32 %v183, 16
        %v198 = vor.u32 %v195, %v196
        %v199 = vsel %vm186, %v191, %v198
        %v200 = vrot.slane %v195, 4
        %v202 = vshrl.u32 %v184, 16
        %v204 = vrot.slane %v202, 7
        %v205 = vshll.u32 %v184, 16
        %v207 = vor.u32 %v204, %v205
        %v208 = vsel %vm186, %v200, %v207
        %211 = vst.msk [vmem:[#allocation3] sm:$0xf] %vm170, %v199
        %212 = vst.msk [vmem:[#allocation3 + $0x4] sm:$0xf] %vm170, %v208
        %v213 = vld [vmem:[#allocation2 + $0x4] sm:$0xf]
        %v214 = vld [vmem:[#allocation2 + $0x8] sm:$0xf]
        %217 = vrot.lane.b32.xlu0 %v213, 8
        %v218 = vpop.permute.xlu0 %217
        %219 = vrot.lane.b32.xlu0 %v214, 8
        %v220 = vpop.permute.xlu0 %219
        %vm223 = vcmask 126016
        %224 = vst.msk [vmem:[#allocation3] sm:$0xf] %vm223, %v218
        %225 = vst.msk [vmem:[#allocation3 + $0x4] sm:$0xf] %vm223, %v220
        %v226 = vld [vmem:[#allocation2 + $0x4] sm:$0xf]
        %v227 = vld [vmem:[#allocation2 + $0x8] sm:$0xf]
        %v228 = vld [vmem:[#allocation2 + $0xc] sm:$0x1]
        %vm229 = vsmask.f32 3328
        %vm230 = vsmask.f32 7440
        %vm231 = vmor %vm229, %vm230
        %v233 = vshrl.u32 %v226, 16
        %v235 = vrot.slane %v233, 4
        %v236 = vshll.u32 %v226, 16
        %v238 = vrot.slane %v236, 5
        %v239 = vor.u32 %v235, %v238
        %v240 = vrot.slane %v239, 4
        %v242 = vshll.u32 %v227, 16
        %v244 = vrot.slane %v242, 5
        %v245 = vsel %vm231, %v240, %v244
        %v246 = vshrl.u32 %v227, 16
        %v248 = vrot.slane %v246, 4
        %v249 = vor.u32 %v248, %v244
        %v250 = vrot.slane %v249, 4
        %v252 = vshll.u32 %v228, 16
        %v254 = vrot.slane %v252, 5
        %v255 = vsel %vm231, %v250, %v254
        %256 = vrot.lane.b32.xlu0 %v245, 16
        %v257 = vpop.permute.xlu0 %256
        %258 = vrot.lane.b32.xlu0 %v255, 16
        %v259 = vpop.permute.xlu0 %258
        %vm262 = vcmask 191616
        %263 = vst.msk [vmem:[#allocation3] sm:$0xf] %vm262, %v257
        %264 = vst.msk [vmem:[#allocation3 + $0x4] sm:$0xf] %vm262, %v259
        %v265 = vld [vmem:[#allocation3] sm:$0xf]
        %v266 = vld [vmem:[#allocation3 + $0x4] sm:$0xf]
        %v267 = vld [vmem:[%s1] sm:$0xf]
        %v268 = vld [vmem:[%s1 + $0x4] sm:$0xf]
        %v269 = vld [vmem:[%s1 + $0x8] sm:$0xf]
        %v270 = vld [vmem:[%s2] sm:$0x1]
        %v272 = vlaneseq
        %v273 = vshrl.u32 %v272, 7
        %v274 = vsub.s32 0, %v273
        %v275 = vrot.slane %v270, %v274
        %v279 = vunpack.c.l.b16 %v265
        %v280 = vunpack.c.l.b16 %v266
        %v281 = vpack.c.b16 %v280, %v279
        %v285 = vunpack.c.l.b16 %v267
        %v286 = vunpack.c.l.b16 %v268
        %v287 = vunpack.c.l.b16 %v269
        %v288 = vpack.c.b16 %v286, %v285
        %v289 = vpack.c.b16 %v287, %v287
        %vm291 = vcmask 195584
        %v293 = vsel %vm291, %v281, 0
        %vm295 = vcmask 1043456
        %v297 = vsel %vm295, %v289, 0
        %299 = vmatprep.subr.bf16.mxu0 0
        %300 = vmatpush1.bf16.msra.mxu0 0
        %301 = vmatprep.subr.bf16.mxu0 0
        %302 = vmatpush1.bf16.msra.mxu0 0
        %303 = vmatprep.subr.bf16.mxu0 0
        %304 = vmatpush1.bf16.msra.mxu0 0
        %305 = vmatprep.subr.bf16.mxu0 0
        %306 = vmatpush1.bf16.msra.mxu0 0
        %307 = vmatprep.subr.bf16.mxu0 0
        %308 = vmatpush1.bf16.msra.mxu0 0
        %309 = vmatprep.subr.bf16.mxu0 0
        %310 = vmatpush1.bf16.msra.mxu0 0
        %311 = vmatprep.subr.bf16.mxu0 0
        %312 = vmatpush1.bf16.msra.mxu0 %v297
        %313 = vmatprep.subr.bf16.mxu0 0
        %314 = vmatpush1.bf16.msra.mxu0 %v288
        %315 = vmatprep.subr.bf16.mxu0 0
        %316 = vmatpush2.bf16.msra.mxu0 0
        %317 = vmatprep.subr.bf16.mxu0 0
        %318 = vmatpush2.bf16.msra.mxu0 0
        %319 = vmatprep.subr.bf16.mxu0 0
        %320 = vmatpush2.bf16.msra.mxu0 0
        %321 = vmatprep.subr.bf16.mxu0 0
        %322 = vmatpush2.bf16.msra.mxu0 0
        %323 = vmatprep.subr.bf16.mxu0 0
        %324 = vmatpush2.bf16.msra.mxu0 0
        %325 = vmatprep.subr.bf16.mxu0 0
        %326 = vmatpush2.bf16.msra.mxu0 0
        %327 = vmatprep.subr.bf16.mxu0 0
        %328 = vmatpush2.bf16.msra.mxu0 0
        %329 = vmatprep.subr.bf16.mxu0 0
        %330 = vmatpush2.bf16.msra.mxu0 0
        %331 = vmatprep.mubr.bf16.mxu0 0
        %332 = vmatmul.mubr.bf16.gmra.mxu0 %v293
        %v333 = vpop.f32.mrf.mxu0
        %v334 = vadd.f32 %v275, %v333
        %v335 = vpop.f32.mrf.mxu0
        %v336 = vpop.f32.mrf.mxu0
        %v337 = vadd.f32 %v275, %v336
        %v338 = vpop.f32.mrf.mxu0
        %339 = vdwg.mxu0
        %vm340 = vcmask 130048
        %341 = vst.msk [vmem:[%s163] sm:$0xff] %vm340, %v334
        %342 = vst.msk [vmem:[%s163 + $0x8] sm:$0xff] %vm340, %v337
        %s343 = sand.u32 %s93, 1
        %s344 = scalar_lea.sflag [#allocation5], %s343
        %s345 = sand.u32 %s93, 1
        %s346 = smul.addr %s345, 16
        %s347 = scalar_lea.vmem [#allocation4], %s346
        // Predicated region
        $region33: #{tpu_custom_call.1} parent=31 // pred_check
          %p348 = pneg %p103
        $region34: #{tpu_custom_call.1} parent=31 // pred_check_branch
          %350 = sbr.rel (%p348) target = $region36
        $region35: #{tpu_custom_call.1} parent=31 // pred_region
          %s352 = ssub.s32 256, 256
          %353 = vsyncadd %s344, %s352
          %s354 = smul.addr %s17, 2
          %s355 = smul.addr %s354, 128
          %s356 = scalar_lea.hbm %s3, %s355
          %s357 = sshll.u32 %s347, 4
          %s358 = int_to_ptr.vmem [resolvable:$true] %s357
          %363 = dma.vmem_to_hbm [thread:$0]  %s358, 256, %s356, %s344, 128, 128, 8
        $region36: #{tpu_custom_call.1} parent=31 // pred_fallthru
          _
      $region32: #{tpu_custom_call.1} parent=5 // pred_fallthru
        _
      %p364 = scmp.le.s32.totalorder 2, %s12
      // Predicated region
      $region37: #{tpu_custom_call.1} parent=5 // pred_check
        %p365 = pneg %p364
      $region38: #{tpu_custom_call.1} parent=5 // pred_check_branch
        %367 = sbr.rel (%p365) target = $region40
      $region39: #{tpu_custom_call.1} parent=5 // pred_region
        %s368 = ssub.s32 %s12, 2
        // Predicated region
        $region41: #{tpu_custom_call.1} parent=39 // pred_check
          %p369 = pneg %p109
        $region42: #{tpu_custom_call.1} parent=39 // pred_check_branch
          %371 = sbr.rel (%p369) target = $region44
        $region43: #{tpu_custom_call.1} parent=39 // pred_region
          %s372 = sand.u32 %s94, 1
          %s373 = scalar_lea.sflag [#allocation5], %s372
          %s374 = sand.u32 %s94, 1
          %s375 = smul.addr %s374, 16
          %s376 = scalar_lea.vmem [#allocation4], %s375
          %377 = dma.done %s373, 256
        $region44: #{tpu_custom_call.1} parent=39 // pred_fallthru
          _
      $region40: #{tpu_custom_call.1} parent=5 // pred_fallthru
        _
    $region6: #{tpu_custom_call.1} parent=1 // loop_footer
      %s16 = sadd.s32 1, %s12
    $region7: #{tpu_custom_call.1} parent=1 // loop_footer_branch
      %11 = sbr.rel target = $region3
    $region8: #{tpu_custom_call.1} parent=1 // loop_exit
      _
    %378 = vsyncpa [#allocation5], 1
    %s379 = scalar_lea.sflag [#allocation5], 1
    %380 = vsyncpa %s379, 1

</llo_original>
